<compile_context>
chip_gen: v7x
topology: tpu7x:2x2x1
jax: 0.10.0
libtpu: 0.0.40
codegen_flags: <defaults>
</compile_context>

<pallas_src>
import functools

import jax
import jax.numpy as jnp
from jax import lax
from jax.experimental import pallas as pl
from jax.experimental.pallas import tpu as pltpu


def _round_up(x, m):
    return ((x + m - 1) // m) * m


def _invariant_spec(block_shape, index_map, single_buffer):
    """BlockSpec for a grid-invariant operand (weights / shift).

    With single_buffer=True, request one pipeline buffer instead of the default
    two (halves the operand's VMEM footprint; matters on v7x's 64 MiB VMEM).
    Falls back to a plain BlockSpec when the jax version lacks pipeline_mode.
    """
    if single_buffer and hasattr(pl, "Buffered"):
        try:
            return pl.BlockSpec(block_shape, index_map,
                                pipeline_mode=pl.Buffered(1))
        except TypeError:  # older jax: BlockSpec has no pipeline_mode kwarg
            pass
    return pl.BlockSpec(block_shape, index_map)


def _convbn_kernel(xm_ref, xh_ref, w_ref, shift_ref, o_ref, *, K, activation):
    """One grid step = one (batch, time-tile) pair.

    xm_ref    : (1, tT, C_in_p)       main input tile  (padded rows [j*tT, (j+1)*tT))
    xh_ref    : (1, H,  C_in_p)       halo tile        (padded rows [(j+1)*tT, (j+1)*tT+H))
    w_ref     : (K, C_in_p, C_out_p)  folded conv weights (BN scale pre-multiplied)
    shift_ref : (1, C_out_p)          folded shift = beta - mean*scale + bias*scale (f32)
    o_ref     : (1, tT, C_out_p)
    """
    tT = o_ref.shape[1]

    # Haloed window of padded-input rows for this tile: (tT + H, C_in_p).
    # Single small copy; the per-tap shifted views below feed K accumulated
    # MXU matmuls instead of materializing a (tT, K*C_in_p) im2col buffer.
    window = jnp.concatenate([xm_ref[0], xh_ref[0]], axis=0)

    acc = jnp.dot(window[0:tT, :], w_ref[0],
                  preferred_element_type=jnp.float32)
    for k in range(1, K):
        # Static sublane-offset slice per tap (Mosaic lowers the shift to
        # sublane rotates that overlap with the previous tap's matmul).
        acc += jnp.dot(window[k:k + tT, :], w_ref[k],
                       preferred_element_type=jnp.float32)

    # Folded conv-bias + BatchNorm (eval mode); epilogue kept in f32 (v5e-safe).
    y = acc + shift_ref[...]
    if activation == "relu":
        y = jnp.maximum(y, 0.0)
    elif activation == "tanh":
        y = jnp.tanh(y)
    # else: identity

    o_ref[0] = y.astype(o_ref.dtype)


def conv_bn_block_ntc(x_btc, weight, bias, gamma, beta, running_mean, running_var,
                      *, eps=1e-5, activation=None,
                      compute_dtype=jnp.bfloat16, out_dtype=jnp.float32,
                      time_block=512, single_buffer_weights=False):
    """ConvBNBlock forward on NTC input. x_btc: (B, T, C_in) -> (B, T, C_out).

    Use this entry point when stacking several ConvBNBlocks so the activations
    stay in (B, T, C) layout between blocks (no per-block HBM transposes).
    """
    B, T, C_in = x_btc.shape
    C_out, C_in_w, K = weight.shape
    assert C_in_w == C_in
    assert (K - 1) % 2 == 0
    pad = (K - 1) // 2

    # ---- parameter folding (one-time, plain JAX) ----
    scale = gamma / jnp.sqrt(running_var + eps)               # (C_out,)
    shift = beta - running_mean * scale + bias * scale        # (C_out,)  conv bias folded in
    w_kio = jnp.transpose(weight, (2, 1, 0)) * scale[None, None, :]  # (K, C_in, C_out)

    # ---- lane padding: channels -> multiples of 128 ----
    C_in_p = _round_up(C_in, 128)
    C_out_p = _round_up(C_out, 128)

    # ---- time tiling with a sublane-aligned halo ----
    sub = 8 if jnp.dtype(compute_dtype).itemsize == 4 else 16
    H = _round_up(max(K - 1, 1), sub)                          # halo rows (>= K-1)
    tT = _round_up(min(time_block, _round_up(T, sub)), H)      # time tile, multiple of H
    nT = (T + tT - 1) // tT
    T_grid = nT * tT
    T_total = T_grid + H
    halo_stride = tT // H

    # Single fused pad: conv 'same' halo + grid round-up + channel lane padding
    # (skipped entirely when nothing needs padding, e.g. pre-padded stacks).
    pads = ((0, 0), (pad, T_total - T - pad), (0, C_in_p - C_in))
    xp = jnp.pad(x_btc, pads) if any(lo or hi for lo, hi in pads) else x_btc
    xp = xp.astype(compute_dtype)

    w_p = jnp.pad(w_kio, ((0, 0), (0, C_in_p - C_in), (0, C_out_p - C_out)))
    w3 = w_p.astype(compute_dtype)                             # (K, C_in_p, C_out_p)
    shift2 = jnp.pad(shift, (0, C_out_p - C_out)).reshape(1, C_out_p).astype(jnp.float32)

    kernel = functools.partial(_convbn_kernel, K=K, activation=activation)

    out = pl.pallas_call(
        kernel,
        out_shape=jax.ShapeDtypeStruct((B, T_grid, C_out_p), out_dtype),
        grid_spec=pltpu.PrefetchScalarGridSpec(
            num_scalar_prefetch=0,
            grid=(B, nT),
            in_specs=[
                pl.BlockSpec((1, tT, C_in_p), lambda b, j: (b, j, 0)),
                pl.BlockSpec((1, H, C_in_p),
                             lambda b, j: (b, (j + 1) * halo_stride, 0)),
                _invariant_spec((K, C_in_p, C_out_p), lambda b, j: (0, 0, 0),
                                single_buffer_weights),
                _invariant_spec((1, C_out_p), lambda b, j: (0, 0),
                                single_buffer_weights),
            ],
            out_specs=pl.BlockSpec((1, tT, C_out_p), lambda b, j: (b, j, 0)),
        ),
        compiler_params=pltpu.CompilerParams(
            dimension_semantics=("parallel", "parallel"),
            vmem_limit_bytes=48 * 1024 * 1024),
    )(xp, xp, w3, shift2)   # padded input passed twice: main tile + halo tile

    return out[:, :T, :C_out]


def conv_bn_block(x_bct, weight, bias, gamma, beta, running_mean, running_var,
                  *, eps=1e-5, activation=None,
                  compute_dtype=jnp.bfloat16, out_dtype=jnp.float32,
                  time_block=512, single_buffer_weights=False):
    """PyTorch-layout wrapper: x_bct (B, C_in, T) -> (B, C_out, T)."""
    x_btc = jnp.transpose(x_bct, (0, 2, 1))
    out_btc = conv_bn_block_ntc(
        x_btc, weight, bias, gamma, beta, running_mean, running_var,
        eps=eps, activation=activation,
        compute_dtype=compute_dtype, out_dtype=out_dtype,
        time_block=time_block, single_buffer_weights=single_buffer_weights)
    return jnp.transpose(out_btc, (0, 2, 1))


def _reference(x_bct, weight, bias, gamma, beta, running_mean, running_var,
               *, eps=1e-5, activation=None):
    """Pure-JAX reference (lax conv) for correctness checking."""
    pad = (weight.shape[-1] - 1) // 2
    y = lax.conv_general_dilated(
        x_bct, weight, window_strides=(1,), padding=[(pad, pad)],
        dimension_numbers=("NCH", "OIH", "NCH"))
    y = y + bias[None, :, None]
    scale = gamma / jnp.sqrt(running_var + eps)
    shift = beta - running_mean * scale
    y = y * scale[None, :, None] + shift[None, :, None]
    if activation == "relu":
        y = jnp.maximum(y, 0.0)
    elif activation == "tanh":
        y = jnp.tanh(y)
    return y


if __name__ == "__main__":
    def run_case(activation, compute_dtype, T, time_block, tol):
        B, C_in, C_out, K = 2, 4, 8, 5
        key = jax.random.PRNGKey(0)
        k_x, k_w, k_b, k_g, k_be, k_m, k_v = jax.random.split(key, 7)

        x = jax.random.normal(k_x, (B, C_in, T), dtype=jnp.float32)
        weight = jax.random.normal(k_w, (C_out, C_in, K), dtype=jnp.float32) * 0.1
        bias = jax.random.normal(k_b, (C_out,), dtype=jnp.float32) * 0.1
        gamma = 1.0 + 0.1 * jax.random.normal(k_g, (C_out,), dtype=jnp.float32)
        beta = 0.1 * jax.random.normal(k_be, (C_out,), dtype=jnp.float32)
        running_mean = 0.1 * jax.random.normal(k_m, (C_out,), dtype=jnp.float32)
        running_var = jnp.abs(1.0 + 0.1 * jax.random.normal(k_v, (C_out,), jnp.float32))

        out = conv_bn_block(x, weight, bias, gamma, beta, running_mean, running_var,
                            activation=activation, compute_dtype=compute_dtype,
                            time_block=time_block)
        out = jax.block_until_ready(out)

        ref = _reference(x, weight, bias, gamma, beta, running_mean, running_var,
                         activation=activation)
        assert out.shape == (B, C_out, T), out.shape
        err = jnp.max(jnp.abs(out - ref))
        assert jnp.allclose(out, ref, atol=tol, rtol=tol), (
            f"mismatch ({activation}, {compute_dtype}): max abs err {err}")

    # Multi-tile time grid (nT = 3, halo crossing tile boundaries), f32 compute.
    run_case("relu", jnp.float32, T=40, time_block=16, tol=1e-3)
    # Single tile, bf16 inputs/weights with f32 accumulation + f32 epilogue.
    run_case("tanh", jnp.bfloat16, T=16, time_block=512, tol=5e-2)
    # Linear (identity) activation path.
    run_case(None, jnp.float32, T=16, time_block=512, tol=1e-3)

    print("KERNEL_OK")
</pallas_src>

<mosaic_0001>
module attributes {stable_mosaic.version = 11 : i64} {
  func.func @_convbn_kernel(%arg0: i32, %arg1: i32, %arg2: memref<1x16x128xf32, #tpu.memory_space<vmem>>, %arg3: memref<1x8x128xf32, #tpu.memory_space<vmem>>, %arg4: memref<5x128x128xf32, #tpu.memory_space<vmem>>, %arg5: memref<1x128xf32, #tpu.memory_space<vmem>>, %arg6: memref<1x16x128xf32, #tpu.memory_space<vmem>>) attributes {dimension_semantics = [#tpu.dimension_semantics<parallel>, #tpu.dimension_semantics<parallel>], iteration_bounds = array<i64: 2, 3>, scalar_prefetch = 0 : i64, scratch_operands = 0 : i64, tpu.core_type = #tpu.core_type<tc>, window_params = [{transform_indices = @transform_0, window_bounds = array<i64: 1, 16, 128>}, {transform_indices = @transform_1, window_bounds = array<i64: 1, 8, 128>}, {pipeline_mode = #tpu.pipeline_mode<synchronous>, transform_indices = @transform_2, window_bounds = array<i64: 5, 128, 128>}, {pipeline_mode = #tpu.pipeline_mode<synchronous>, transform_indices = @transform_3, window_bounds = array<i64: 1, 128>}, {transform_indices = @transform_4, window_bounds = array<i64: 1, 16, 128>}]} {
    %c0 = arith.constant 0 : index
    %c0_0 = arith.constant 0 : index
    %c0_1 = arith.constant 0 : index
    %0 = vector.load %arg2[%c0, %c0_0, %c0_1] : memref<1x16x128xf32, #tpu.memory_space<vmem>>, vector<1x16x128xf32>
    %1 = vector.shape_cast %0 : vector<1x16x128xf32> to vector<16x128xf32>
    %c0_2 = arith.constant 0 : index
    %c0_3 = arith.constant 0 : index
    %c0_4 = arith.constant 0 : index
    %2 = vector.load %arg3[%c0_2, %c0_3, %c0_4] : memref<1x8x128xf32, #tpu.memory_space<vmem>>, vector<1x8x128xf32>
    %3 = vector.shape_cast %2 : vector<1x8x128xf32> to vector<8x128xf32>
    %4 = tpu.concatenate %1, %3 in 0 : vector<16x128xf32>, vector<8x128xf32> -> vector<24x128xf32>
    %5 = vector.extract_strided_slice %4 {offsets = [0, 0], sizes = [16, 128], strides = [1, 1]} : vector<24x128xf32> to vector<16x128xf32>
    %c0_5 = arith.constant 0 : index
    %c0_6 = arith.constant 0 : index
    %c0_7 = arith.constant 0 : index
    %6 = vector.load %arg4[%c0_5, %c0_6, %c0_7] : memref<5x128x128xf32, #tpu.memory_space<vmem>>, vector<1x128x128xf32>
    %7 = vector.shape_cast %6 : vector<1x128x128xf32> to vector<128x128xf32>
    %cst = arith.constant dense<0.000000e+00> : vector<16x128xf32>
    %8 = tpu.matmul %5, %7, %cst {dimension_numbers = #tpu.dot_dimension_numbers<[1], [0], [0], [1], [0, 0, 1, 1], [], []>} : vector<16x128xf32>, vector<128x128xf32>, vector<16x128xf32> -> vector<16x128xf32>
    %9 = vector.extract_strided_slice %4 {offsets = [1, 0], sizes = [16, 128], strides = [1, 1]} : vector<24x128xf32> to vector<16x128xf32>
    %c1 = arith.constant 1 : index
    %c0_8 = arith.constant 0 : index
    %c0_9 = arith.constant 0 : index
    %10 = vector.load %arg4[%c1, %c0_8, %c0_9] : memref<5x128x128xf32, #tpu.memory_space<vmem>>, vector<1x128x128xf32>
    %11 = vector.shape_cast %10 : vector<1x128x128xf32> to vector<128x128xf32>
    %cst_10 = arith.constant dense<0.000000e+00> : vector<16x128xf32>
    %12 = tpu.matmul %9, %11, %cst_10 {dimension_numbers = #tpu.dot_dimension_numbers<[1], [0], [0], [1], [0, 0, 1, 1], [], []>} : vector<16x128xf32>, vector<128x128xf32>, vector<16x128xf32> -> vector<16x128xf32>
    %13 = arith.addf %8, %12 : vector<16x128xf32>
    %14 = vector.extract_strided_slice %4 {offsets = [2, 0], sizes = [16, 128], strides = [1, 1]} : vector<24x128xf32> to vector<16x128xf32>
    %c2 = arith.constant 2 : index
    %c0_11 = arith.constant 0 : index
    %c0_12 = arith.constant 0 : index
    %15 = vector.load %arg4[%c2, %c0_11, %c0_12] : memref<5x128x128xf32, #tpu.memory_space<vmem>>, vector<1x128x128xf32>
    %16 = vector.shape_cast %15 : vector<1x128x128xf32> to vector<128x128xf32>
    %cst_13 = arith.constant dense<0.000000e+00> : vector<16x128xf32>
    %17 = tpu.matmul %14, %16, %cst_13 {dimension_numbers = #tpu.dot_dimension_numbers<[1], [0], [0], [1], [0, 0, 1, 1], [], []>} : vector<16x128xf32>, vector<128x128xf32>, vector<16x128xf32> -> vector<16x128xf32>
    %18 = arith.addf %13, %17 : vector<16x128xf32>
    %19 = vector.extract_strided_slice %4 {offsets = [3, 0], sizes = [16, 128], strides = [1, 1]} : vector<24x128xf32> to vector<16x128xf32>
    %c3 = arith.constant 3 : index
    %c0_14 = arith.constant 0 : index
    %c0_15 = arith.constant 0 : index
    %20 = vector.load %arg4[%c3, %c0_14, %c0_15] : memref<5x128x128xf32, #tpu.memory_space<vmem>>, vector<1x128x128xf32>
    %21 = vector.shape_cast %20 : vector<1x128x128xf32> to vector<128x128xf32>
    %cst_16 = arith.constant dense<0.000000e+00> : vector<16x128xf32>
    %22 = tpu.matmul %19, %21, %cst_16 {dimension_numbers = #tpu.dot_dimension_numbers<[1], [0], [0], [1], [0, 0, 1, 1], [], []>} : vector<16x128xf32>, vector<128x128xf32>, vector<16x128xf32> -> vector<16x128xf32>
    %23 = arith.addf %18, %22 : vector<16x128xf32>
    %24 = vector.extract_strided_slice %4 {offsets = [4, 0], sizes = [16, 128], strides = [1, 1]} : vector<24x128xf32> to vector<16x128xf32>
    %c4 = arith.constant 4 : index
    %c0_17 = arith.constant 0 : index
    %c0_18 = arith.constant 0 : index
    %25 = vector.load %arg4[%c4, %c0_17, %c0_18] : memref<5x128x128xf32, #tpu.memory_space<vmem>>, vector<1x128x128xf32>
    %26 = vector.shape_cast %25 : vector<1x128x128xf32> to vector<128x128xf32>
    %cst_19 = arith.constant dense<0.000000e+00> : vector<16x128xf32>
    %27 = tpu.matmul %24, %26, %cst_19 {dimension_numbers = #tpu.dot_dimension_numbers<[1], [0], [0], [1], [0, 0, 1, 1], [], []>} : vector<16x128xf32>, vector<128x128xf32>, vector<16x128xf32> -> vector<16x128xf32>
    %28 = arith.addf %23, %27 : vector<16x128xf32>
    %c0_20 = arith.constant 0 : index
    %c0_21 = arith.constant 0 : index
    %29 = vector.load %arg5[%c0_20, %c0_21] : memref<1x128xf32, #tpu.memory_space<vmem>>, vector<1x128xf32>
    %30 = vector.broadcast %29 : vector<1x128xf32> to vector<16x128xf32>
    %31 = arith.addf %28, %30 : vector<16x128xf32>
    %cst_22 = arith.constant 0.000000e+00 : f32
    %32 = vector.broadcast %cst_22 : f32 to vector<16x128xf32>
    %33 = arith.maximumf %31, %32 : vector<16x128xf32>
    %c0_23 = arith.constant 0 : index
    %c0_24 = arith.constant 0 : index
    %c0_25 = arith.constant 0 : index
    %34 = vector.load %arg6[%c0_23, %c0_24, %c0_25] : memref<1x16x128xf32, #tpu.memory_space<vmem>>, vector<1x16x128xf32>
    %35 = vector.shape_cast %34 : vector<1x16x128xf32> to vector<16x128xf32>
    %36 = vector.shape_cast %33 : vector<16x128xf32> to vector<1x16x128xf32>
    tpu.vector_store %arg6[%c0_23, %c0_24, %c0_25], %36 {strides = array<i32>} : memref<1x16x128xf32, #tpu.memory_space<vmem>>, vector<1x16x128xf32>,
    return
  }
  func.func @transform_0(%arg0: i32, %arg1: i32) -> (i32, i32, i32) {
    %c0_i32 = arith.constant 0 : i32
    %c0_i32_0 = arith.constant 0 : i32
    return %arg0, %arg1, %c0_i32 : i32, i32, i32
  }
  func.func @transform_1(%arg0: i32, %arg1: i32) -> (i32, i32, i32) {
    %c1_i32 = arith.constant 1 : i32
    %0 = arith.addi %arg1, %c1_i32 : i32
    %c2_i32 = arith.constant 2 : i32
    %1 = arith.muli %0, %c2_i32 : i32
    %c0_i32 = arith.constant 0 : i32
    %c0_i32_0 = arith.constant 0 : i32
    return %arg0, %1, %c0_i32 : i32, i32, i32
  }
  func.func @transform_2(%arg0: i32, %arg1: i32) -> (i32, i32, i32) {
    %c0_i32 = arith.constant 0 : i32
    %c0_i32_0 = arith.constant 0 : i32
    %c0_i32_1 = arith.constant 0 : i32
    %c0_i32_2 = arith.constant 0 : i32
    return %c0_i32, %c0_i32_0, %c0_i32_1 : i32, i32, i32
  }
  func.func @transform_3(%arg0: i32, %arg1: i32) -> (i32, i32) {
    %c0_i32 = arith.constant 0 : i32
    %c0_i32_0 = arith.constant 0 : i32
    %c0_i32_1 = arith.constant 0 : i32
    return %c0_i32, %c0_i32_0 : i32, i32
  }
  func.func @transform_4(%arg0: i32, %arg1: i32) -> (i32, i32, i32) {
    %c0_i32 = arith.constant 0 : i32
    %c0_i32_0 = arith.constant 0 : i32
    return %arg0, %arg1, %c0_i32 : i32, i32, i32
  }
}

</mosaic_0001>

<llo_original>
// kernel: tpu_custom_call.1
$region0: #{tpu_custom_call.1}
  #allocation0 [shape = 'u32[]', space=smem, size = 0x4, offset = 0x4, fixed_abs, tag = 'smem constant byte address 0x4 - core index']
  #allocation1 [shape = 'u32[144,128]{1,0:T(1,128)}', space=vmem, size = 0x12000, scoped, tag = 'internal scratch']
  %s0 = inlined_call_operand.hbm [shape: f32[2,56,128], index: 0, kind: input, shape index: {}]
  %s1 = inlined_call_operand.hbm [shape: f32[2,56,128], index: 1, kind: input, shape index: {}]
  %s2 = inlined_call_operand.hbm [shape: f32[5,128,128], index: 2, kind: input, shape index: {}]
  %s3 = inlined_call_operand.vmem [shape: f32[1,128], index: 3, kind: input, shape index: {}]
  %s4 = inlined_call_operand.hbm [shape: f32[2,48,128], index: 4, kind: output, shape index: {}]
  %s5 = sld [smem:[#allocation0]]
  $region61: #{tpu_custom_call.1} parent=0
    _
  %s7 = ssub.s32 1, %s5
  %s8 = scalar_select 0, %s7, %s5
  $region1: #{tpu_custom_call.1} parent=0
    #allocation2 [shape = 'u8[16384]{0}', space=vmem, size = 0x4000, scoped, tag = 'input window, operand 0']
    #allocation3 [shape = 's32[2]{0}', space=sflag, size = 0x8, scoped, tag = 'scoped memory for tpu_custom_call.1']
    #allocation4 [shape = 's32[2]{0}', space=sflag, size = 0x8, scoped, tag = 'scoped memory for tpu_custom_call.1']
    #allocation5 [shape = 'u8[8192]{0}', space=vmem, size = 0x2000, scoped, tag = 'input window, operand 1']
    #allocation6 [shape = 's32[2]{0}', space=sflag, size = 0x8, scoped, tag = 'scoped memory for tpu_custom_call.1']
    #allocation7 [shape = 'u8[327680]{0}', space=vmem, size = 0x50000, scoped, tag = 'input window, operand 2, single buffered']
    #allocation8 [shape = 'u8[16384]{0}', space=vmem, size = 0x4000, scoped, tag = 'output window, operand 0']
    %9 = vsyncpa [#allocation3], 0
    %s10 = scalar_lea.sflag [#allocation3], 1
    %11 = vsyncpa %s10, 0
    %12 = vsyncpa [#allocation6], 0
    %s13 = scalar_lea.sflag [#allocation6], 1
    %14 = vsyncpa %s13, 0
    %15 = vsyncpa [#allocation4], 0
    %s16 = scalar_lea.sflag [#allocation4], 1
    %17 = vsyncpa %s16, 0
    loop: start=0, step=1, limit=8
    $region2: #{tpu_custom_call.1} parent=1 // loop_pre_header
      _
    $region3: #{tpu_custom_call.1} parent=1 // loop_header
      %s19 = sphi 0, %s23
      %p20 = scmp.ge.s32.totalorder %s19, 8
      %s26 = sphi 0, %s38
      %s27 = sphi 0, %s34
      %s28 = sphi 0, %s26
      %s29 = sphi 0, %s27
      %s30 = sphi 0, %s28
      %s31 = sphi 0, %s29
      %s43 = sphi 0, %s45
      %s46 = sphi 0, %s43
      %s47 = sphi 0, %s46
      %s63 = sphi 0, %s47
      %s75 = sphi 0, %s77
      %s78 = sphi 0, %s75
      %s79 = sphi 0, %s78
      %s95 = sphi 0, %s79
      %s99 = sphi 0, %s99
      %s101 = sphi 0, %s99
      %s102 = sphi 0, %s101
      %s116 = sphi 0, %s102
      %s120 = sphi 0, %s120
      %s122 = sphi 0, %s120
      %s123 = sphi 0, %s122
      %s137 = sphi 0, %s123
      %s145 = sphi 0, %s147
      %s148 = sphi 0, %s145
      %s149 = sphi 0, %s148
      %s165 = sphi 0, %s149
    $region4: #{tpu_custom_call.1} parent=1 // loop_header_branch
      %22 = sbr.rel (%p20) target = $region8
    $region5: #{tpu_custom_call.1} parent=1 // loop_body
      %s24 = ssub.s32 %s19, 1
      %s25 = ssub.s32 %s19, 2
      %s32 = sadd.s32 1, %s27
      %p33 = scmp.ge.s32.totalorder %s32, 3
      %s34 = scalar_select %p33, 0, %s32
      %s35 = sadd.s32 1, %s26
      %s36 = scalar_select %p33, %s35, %s26
      %p37 = scmp.ge.s32.totalorder %s36, 2
      %s38 = scalar_select %p37, 0, %s36
      %s39 = ssub.s32 %s26, %s38
      %s40 = ssub.s32 %s27, %s34
      %s41 = sor.u32 %s39, %s40
      %p42 = scmp.eq.s32.totalorder %s41, 0
      %s44 = sadd.s32 %s43, 1
      %s45 = scalar_select %p42, %s43, %s44
      %p48 = pneg %p42
      %p49 = scmp.eq.s32.totalorder %s19, 5
      %p50 = por %p48, %p49
      %p51 = scmp.ne.s32.totalorder %s43, %s46
      %p52 = scmp.eq.s32.totalorder %s19, 0
      %p53 = por %p51, %p52
      %p54 = scmp.ne.s32.totalorder %s43, %s46
      %p55 = scmp.eq.s32.totalorder %s24, 5
      %p56 = por %p54, %p55
      %p57 = scmp.ne.s32.totalorder %s46, %s47
      %p58 = scmp.eq.s32.totalorder %s24, 0
      %p59 = por %p57, %p58
      %p60 = scmp.ne.s32.totalorder %s46, %s47
      %p61 = scmp.eq.s32.totalorder %s25, 5
      %p62 = por %p60, %p61
      %p64 = scmp.ne.s32.totalorder %s47, %s63
      %p65 = scmp.eq.s32.totalorder %s25, 0
      %p66 = por %p64, %p65
      %s67 = sadd.s32 %s27, 1
      %s68 = smul.u32 %s67, 2
      %s69 = sadd.s32 %s34, 1
      %s70 = smul.u32 %s69, 2
      %s71 = ssub.s32 %s26, %s38
      %s72 = ssub.s32 %s68, %s70
      %s73 = sor.u32 %s71, %s72
      %p74 = scmp.eq.s32.totalorder %s73, 0
      %s76 = sadd.s32 %s75, 1
      %s77 = scalar_select %p74, %s75, %s76
      %p80 = pneg %p74
      %p81 = scmp.eq.s32.totalorder %s19, 5
      %p82 = por %p80, %p81
      %p83 = scmp.ne.s32.totalorder %s75, %s78
      %p84 = scmp.eq.s32.totalorder %s19, 0
      %p85 = por %p83, %p84
      %p86 = scmp.ne.s32.totalorder %s75, %s78
      %p87 = scmp.eq.s32.totalorder %s24, 5
      %p88 = por %p86, %p87
      %p89 = scmp.ne.s32.totalorder %s78, %s79
      %p90 = scmp.eq.s32.totalorder %s24, 0
      %p91 = por %p89, %p90
      %p92 = scmp.ne.s32.totalorder %s78, %s79
      %p93 = scmp.eq.s32.totalorder %s25, 5
      %p94 = por %p92, %p93
      %p96 = scmp.ne.s32.totalorder %s79, %s95
      %p97 = scmp.eq.s32.totalorder %s25, 0
      %p98 = por %p96, %p97
      %s100 = sadd.s32 %s99, 1
      %p103 = scmp.eq.s32.totalorder %s19, 5
      %p104 = scmp.ne.s32.totalorder %s99, %s101
      %p105 = scmp.eq.s32.totalorder %s19, 0
      %p106 = por %p104, %p105
      %p107 = scmp.ne.s32.totalorder %s99, %s101
      %p108 = scmp.eq.s32.totalorder %s24, 5
      %p109 = por %p107, %p108
      %p110 = scmp.ne.s32.totalorder %s101, %s102
      %p111 = scmp.eq.s32.totalorder %s24, 0
      %p112 = por %p110, %p111
      %p113 = scmp.ne.s32.totalorder %s101, %s102
      %p114 = scmp.eq.s32.totalorder %s25, 5
      %p115 = por %p113, %p114
      %p117 = scmp.ne.s32.totalorder %s102, %s116
      %p118 = scmp.eq.s32.totalorder %s25, 0
      %p119 = por %p117, %p118
      %s121 = sadd.s32 %s120, 1
      %p124 = scmp.eq.s32.totalorder %s19, 5
      %p125 = scmp.ne.s32.totalorder %s120, %s122
      %p126 = scmp.eq.s32.totalorder %s19, 0
      %p127 = por %p125, %p126
      %p128 = scmp.ne.s32.totalorder %s120, %s122
      %p129 = scmp.eq.s32.totalorder %s24, 5
      %p130 = por %p128, %p129
      %p131 = scmp.ne.s32.totalorder %s122, %s123
      %p132 = scmp.eq.s32.totalorder %s24, 0
      %p133 = por %p131, %p132
      %p134 = scmp.ne.s32.totalorder %s122, %s123
      %p135 = scmp.eq.s32.totalorder %s25, 5
      %p136 = por %p134, %p135
      %p138 = scmp.ne.s32.totalorder %s123, %s137
      %p139 = scmp.eq.s32.totalorder %s25, 0
      %p140 = por %p138, %p139
      %s141 = ssub.s32 %s26, %s38
      %s142 = ssub.s32 %s27, %s34
      %s143 = sor.u32 %s141, %s142
      %p144 = scmp.eq.s32.totalorder %s143, 0
      %s146 = sadd.s32 %s145, 1
      %s147 = scalar_select %p144, %s145, %s146
      %p150 = pneg %p144
      %p151 = scmp.eq.s32.totalorder %s19, 5
      %p152 = por %p150, %p151
      %p153 = scmp.ne.s32.totalorder %s145, %s148
      %p154 = scmp.eq.s32.totalorder %s19, 0
      %p155 = por %p153, %p154
      %p156 = scmp.ne.s32.totalorder %s145, %s148
      %p157 = scmp.eq.s32.totalorder %s24, 5
      %p158 = por %p156, %p157
      %p159 = scmp.ne.s32.totalorder %s148, %s149
      %p160 = scmp.eq.s32.totalorder %s24, 0
      %p161 = por %p159, %p160
      %p162 = scmp.ne.s32.totalorder %s148, %s149
      %p163 = scmp.eq.s32.totalorder %s25, 5
      %p164 = por %p162, %p163
      %p166 = scmp.ne.s32.totalorder %s149, %s165
      %p167 = scmp.eq.s32.totalorder %s25, 0
      %p168 = por %p166, %p167
      %p169 = scmp.le.s32.totalorder 1, %s19
      %p170 = scmp.lt.s32.totalorder %s19, 7
      %p171 = pnand %p169, %p170
      %p172 = pneg %p171
      // Predicated region
      $region9: #{tpu_custom_call.1} parent=5 // pred_check
        _
      $region10: #{tpu_custom_call.1} parent=5 // pred_check_branch
        %174 = sbr.rel (%p171) target = $region12
      $region11: #{tpu_custom_call.1} parent=5 // pred_region
        %s175 = ssub.s32 %s19, 1
        // Predicated region
        $region13: #{tpu_custom_call.1} parent=11 // pred_check
          %p176 = pneg %p112
        $region14: #{tpu_custom_call.1} parent=11 // pred_check_branch
          %178 = sbr.rel (%p176) target = $region16
        $region15: #{tpu_custom_call.1} parent=11 // pred_region
          %s180 = ssub.s32 10240, 10240
          %181 = vsyncadd [#allocation6], %s180
          %s182 = sshll.u32 [#allocation7], 4
          %s183 = int_to_ptr.vmem [resolvable:$true] %s182
          %188 = dma.hbm_to_vmem [thread:$0]  %s2, 10240, %s183, [#allocation6], 128, 128, 8
        $region16: #{tpu_custom_call.1} parent=11 // pred_fallthru
          _
        // Predicated region
        $region17: #{tpu_custom_call.1} parent=11 // pred_check
          %p189 = pneg %p133
        $region18: #{tpu_custom_call.1} parent=11 // pred_check_branch
          %191 = sbr.rel (%p189) target = $region20
        $region19: #{tpu_custom_call.1} parent=11 // pred_region
          _
        $region20: #{tpu_custom_call.1} parent=11 // pred_fallthru
          _
      $region12: #{tpu_custom_call.1} parent=5 // pred_fallthru
        _
      %p192 = scmp.lt.s32.totalorder %s19, 6
      // Predicated region
      $region21: #{tpu_custom_call.1} parent=5 // pred_check
        %p193 = pneg %p192
      $region22: #{tpu_custom_call.1} parent=5 // pred_check_branch
        %195 = sbr.rel (%p193) target = $region24
      $region23: #{tpu_custom_call.1} parent=5 // pred_region
        // Predicated region
        $region25: #{tpu_custom_call.1} parent=23 // pred_check
          %p196 = pneg %p53
        $region26: #{tpu_custom_call.1} parent=23 // pred_check_branch
          %198 = sbr.rel (%p196) target = $region28
        $region27: #{tpu_custom_call.1} parent=23 // pred_region
          %s199 = sand.u32 %s43, 1
          %s200 = scalar_lea.sflag [#allocation3], %s199
          %s201 = sand.u32 %s43, 1
          %s202 = smul.addr %s201, 16
          %s203 = scalar_lea.vmem [#allocation2], %s202
          %s204 = smul.u32 2, %s27
          %s205 = ssub.s32 7, %s204
          %p206 = scmp.lt.s32.totalorder %s205, 2
          %s207 = scalar_select %p206, %s205, 2
          %s208 = smul.u32 128, %s207
          %s210 = ssub.s32 256, %s208
          %211 = vsyncadd %s200, %s210
          %p212 = scmp.ne.s32.totalorder 0, %s208
          %s213 = smul.addr %s26, 7
          %s214 = sadd.s32 %s204, %s213
          %s215 = smul.addr %s214, 128
          %s216 = scalar_lea.hbm %s0, %s215
          %s217 = smul.u32 8, %s207
          %s218 = sshll.u32 %s203, 4
          %s219 = int_to_ptr.vmem [resolvable:$true] %s218
          %s220 = sshll.u32 %s217, 4
          %224 = dma.hbm_to_vmem [thread:$0]  (%p212), %s216, %s220, %s219, %s200, 128, 128, 8
        $region28: #{tpu_custom_call.1} parent=23 // pred_fallthru
          _
        // Predicated region
        $region29: #{tpu_custom_call.1} parent=23 // pred_check
          %p225 = pneg %p85
        $region30: #{tpu_custom_call.1} parent=23 // pred_check_branch
          %227 = sbr.rel (%p225) target = $region32
        $region31: #{tpu_custom_call.1} parent=23 // pred_region
          %s228 = sand.u32 %s19, 1
          %s229 = scalar_lea.sflag [#allocation6], %s228
          %s230 = sand.u32 %s75, 1
          %s231 = smul.addr %s230, 8
          %s232 = scalar_lea.vmem [#allocation5], %s231
          %s233 = sadd.s32 %s27, 1
          %s234 = smul.u32 %s233, 2
          %s236 = ssub.s32 128, 128
          %237 = vsyncadd %s229, %s236
          %s238 = smul.addr %s26, 7
          %s239 = sadd.s32 %s234, %s238
          %s240 = smul.addr %s239, 128
          %s241 = scalar_lea.hbm %s1, %s240
          %s243 = sshll.u32 %s232, 4
          %s244 = int_to_ptr.vmem [resolvable:$true] %s243
          %246 = dma.hbm_to_vmem [thread:$0]  %s241, 128, %s244, %s229
        $region32: #{tpu_custom_call.1} parent=23 // pred_fallthru
          _
      $region24: #{tpu_custom_call.1} parent=5 // pred_fallthru
        _
      %p247 = scmp.le.s32.totalorder 1, %s19
      %p248 = scmp.lt.s32.totalorder %s19, 7
      %p249 = pnand %p247, %p248
      %p250 = pneg %p249
      // Predicated region
      $region33: #{tpu_custom_call.1} parent=5 // pred_check
        _
      $region34: #{tpu_custom_call.1} parent=5 // pred_check_branch
        %252 = sbr.rel (%p249) target = $region36
      $region35: #{tpu_custom_call.1} parent=5 // pred_region
        %s253 = ssub.s32 %s19, 1
        %s254 = sand.u32 %s46, 1
        %s255 = scalar_lea.sflag [#allocation3], %s254
        %s256 = sand.u32 %s46, 1
        %s257 = smul.addr %s256, 16
        %s258 = scalar_lea.vmem [#allocation2], %s257
        // Predicated region
        $region37: #{tpu_custom_call.1} parent=35 // pred_check
          %p259 = pneg %p59
        $region38: #{tpu_custom_call.1} parent=35 // pred_check_branch
          %261 = sbr.rel (%p259) target = $region40
        $region39: #{tpu_custom_call.1} parent=35 // pred_region
          %262 = dma.done %s255, 256
        $region40: #{tpu_custom_call.1} parent=35 // pred_fallthru
          _
        %s263 = sand.u32 %s24, 1
        %s264 = scalar_lea.sflag [#allocation6], %s263
        %s265 = sand.u32 %s78, 1
        %s266 = smul.addr %s265, 8
        %s267 = scalar_lea.vmem [#allocation5], %s266
        // Predicated region
        $region41: #{tpu_custom_call.1} parent=35 // pred_check
          %p268 = pneg %p91
        $region42: #{tpu_custom_call.1} parent=35 // pred_check_branch
          %270 = sbr.rel (%p268) target = $region44
        $region43: #{tpu_custom_call.1} parent=35 // pred_region
          %271 = dma.done %s264, 128
        $region44: #{tpu_custom_call.1} parent=35 // pred_fallthru
          _
        // Predicated region
        $region45: #{tpu_custom_call.1} parent=35 // pred_check
          %p272 = pneg %p112
        $region46: #{tpu_custom_call.1} parent=35 // pred_check_branch
          %274 = sbr.rel (%p272) target = $region48
        $region47: #{tpu_custom_call.1} parent=35 // pred_region
          %275 = dma.done [#allocation6], 10240
        $region48: #{tpu_custom_call.1} parent=35 // pred_fallthru
          _
        %s276 = sand.u32 %s46, 1
        %s277 = scalar_lea.sflag [#allocation3], %s276
        %s278 = sand.u32 %s46, 1
        %s279 = smul.addr %s278, 16
        %s280 = scalar_lea.vmem [#allocation2], %s279
        %p281 = pneg %p59
        %p282 = pneg %p56
        %s283 = sand.u32 %s24, 1
        %s284 = scalar_lea.sflag [#allocation6], %s283
        %s285 = sand.u32 %s78, 1
        %s286 = smul.addr %s285, 8
        %s287 = scalar_lea.vmem [#allocation5], %s286
        %p288 = pneg %p91
        %p289 = pneg %p88
        %p290 = pneg %p112
        %p291 = pneg %p109
        %p292 = pneg %p133
        %p293 = pneg %p130
        %p294 = pneg %p161
        %p295 = pneg %p158
        %s296 = sand.u32 %s148, 1
        %s297 = scalar_lea.sflag [#allocation4], %s296
        %s298 = sand.u32 %s148, 1
        %s299 = smul.addr %s298, 16
        %s300 = scalar_lea.vmem [#allocation8], %s299
        %s301 = smul.u32 2, %s29
        %s302 = ssub.s32 7, %s301
        %p303 = scmp.lt.s32.totalorder %s302, 2
        %s304 = scalar_select %p303, %s302, 2
        %s305 = smul.u32 128, %s304
        %s306 = sadd.s32 %s29, 1
        %s307 = smul.u32 %s306, 2
        %s308 = smul.u32 2, %s29
        %v309 = vld [vmem:[%s258] sm:$0xff]
        %v310 = vld [vmem:[%s258 + $0x8] sm:$0xff]
        %v311 = vld [vmem:[%s267] sm:$0xff]
        %v312 = vld [vmem:[#allocation7] sm:$0xff]
        %v313 = vld [vmem:[#allocation7 + $0x8] sm:$0xff]
        %v314 = vld [vmem:[#allocation7 + $0x10] sm:$0xff]
        %v315 = vld [vmem:[#allocation7 + $0x18] sm:$0xff]
        %v316 = vld [vmem:[#allocation7 + $0x20] sm:$0xff]
        %v317 = vld [vmem:[#allocation7 + $0x28] sm:$0xff]
        %v318 = vld [vmem:[#allocation7 + $0x30] sm:$0xff]
        %v319 = vld [vmem:[#allocation7 + $0x38] sm:$0xff]
        %v320 = vld [vmem:[#allocation7 + $0x40] sm:$0xff]
        %v321 = vld [vmem:[#allocation7 + $0x48] sm:$0xff]
        %v322 = vld [vmem:[#allocation7 + $0x50] sm:$0xff]
        %v323 = vld [vmem:[#allocation7 + $0x58] sm:$0xff]
        %v324 = vld [vmem:[#allocation7 + $0x60] sm:$0xff]
        %v325 = vld [vmem:[#allocation7 + $0x68] sm:$0xff]
        %v326 = vld [vmem:[#allocation7 + $0x70] sm:$0xff]
        %v327 = vld [vmem:[#allocation7 + $0x78] sm:$0xff]
        %s328 = scalar_lea.vmem [#allocation7], 128
        %v329 = vld [vmem:[%s328] sm:$0xff]
        %v330 = vld [vmem:[%s328 + $0x8] sm:$0xff]
        %v331 = vld [vmem:[%s328 + $0x10] sm:$0xff]
        %v332 = vld [vmem:[%s328 + $0x18] sm:$0xff]
        %v333 = vld [vmem:[%s328 + $0x20] sm:$0xff]
        %v334 = vld [vmem:[%s328 + $0x28] sm:$0xff]
        %v335 = vld [vmem:[%s328 + $0x30] sm:$0xff]
        %v336 = vld [vmem:[%s328 + $0x38] sm:$0xff]
        %v337 = vld [vmem:[%s328 + $0x40] sm:$0xff]
        %v338 = vld [vmem:[%s328 + $0x48] sm:$0xff]
        %v339 = vld [vmem:[%s328 + $0x50] sm:$0xff]
        %v340 = vld [vmem:[%s328 + $0x58] sm:$0xff]
        %v341 = vld [vmem:[%s328 + $0x60] sm:$0xff]
        %v342 = vld [vmem:[%s328 + $0x68] sm:$0xff]
        %v343 = vld [vmem:[%s328 + $0x70] sm:$0xff]
        %v344 = vld [vmem:[%s328 + $0x78] sm:$0xff]
        %vm348 = vcmask 1046528
        %v349 = vrot.slane %v309, 1
        %v350 = vrot.slane %v310, 1
        %v351 = vsel %vm348, %v349, %v350
        %v352 = vrot.slane %v311, 1
        %v353 = vsel %vm348, %v350, %v352
        %356 = vmatprep.subr.mxu0 0.0
        %357 = vmatpush1.msra.mxu0 %v329
        %358 = vmatprep.subr.mxu0 0.0
        %359 = vmatpush1.msra.mxu0 %v330
        %360 = vmatprep.subr.mxu0 0.0
        %361 = vmatpush1.msra.mxu0 %v331
        %362 = vmatprep.subr.mxu0 0.0
        %363 = vmatpush1.msra.mxu0 %v332
        %364 = vmatprep.subr.mxu0 0.0
        %365 = vmatpush1.msra.mxu0 %v333
        %366 = vmatprep.subr.mxu0 0.0
        %367 = vmatpush1.msra.mxu0 %v334
        %368 = vmatprep.subr.mxu0 0.0
        %369 = vmatpush1.msra.mxu0 %v335
        %370 = vmatprep.subr.mxu0 0.0
        %371 = vmatpush1.msra.mxu0 %v336
        %372 = vmatprep.subr.mxu0 0.0
        %373 = vmatpush1.msra.mxu0 %v337
        %374 = vmatprep.subr.mxu0 0.0
        %375 = vmatpush1.msra.mxu0 %v338
        %376 = vmatprep.subr.mxu0 0.0
        %377 = vmatpush1.msra.mxu0 %v339
        %378 = vmatprep.subr.mxu0 0.0
        %379 = vmatpush1.msra.mxu0 %v340
        %380 = vmatprep.subr.mxu0 0.0
        %381 = vmatpush1.msra.mxu0 %v341
        %382 = vmatprep.subr.mxu0 0.0
        %383 = vmatpush1.msra.mxu0 %v342
        %384 = vmatprep.subr.mxu0 0.0
        %385 = vmatpush1.msra.mxu0 %v343
        %386 = vmatprep.subr.mxu0 0.0
        %387 = vmatpush1.msra.mxu0 %v344
        %388 = vmatprep.subr.mxu0 0.0
        %389 = vmatpush1.msra.mxu0 0.0
        %390 = vmatprep.subr.mxu0 0.0
        %391 = vmatpush1.msra.mxu0 0.0
        %392 = vmatprep.subr.mxu0 0.0
        %393 = vmatpush1.msra.mxu0 0.0
        %394 = vmatprep.subr.mxu0 0.0
        %395 = vmatpush1.msra.mxu0 0.0
        %396 = vmatprep.subr.mxu0 0.0
        %397 = vmatpush1.msra.mxu0 0.0
        %398 = vmatprep.subr.mxu0 0.0
        %399 = vmatpush1.msra.mxu0 0.0
        %400 = vmatprep.subr.mxu0 0.0
        %401 = vmatpush1.msra.mxu0 0.0
        %402 = vmatprep.subr.mxu0 0.0
        %403 = vmatpush1.msra.mxu0 0.0
        %404 = vmatprep.subr.mxu0 0.0
        %405 = vmatpush1.msra.mxu0 0.0
        %406 = vmatprep.subr.mxu0 0.0
        %407 = vmatpush1.msra.mxu0 0.0
        %408 = vmatprep.subr.mxu0 0.0
        %409 = vmatpush1.msra.mxu0 0.0
        %410 = vmatprep.subr.mxu0 0.0
        %411 = vmatpush1.msra.mxu0 0.0
        %412 = vmatprep.subr.mxu0 0.0
        %413 = vmatpush1.msra.mxu0 0.0
        %414 = vmatprep.subr.mxu0 0.0
        %415 = vmatpush1.msra.mxu0 0.0
        %416 = vmatprep.subr.mxu0 0.0
        %417 = vmatpush1.msra.mxu0 0.0
        %418 = vmatprep.subr.mxu0 0.0
        %419 = vmatpush1.msra.mxu0 0.0
        %420 = vmatprep.mubr.f32.mxu0 0.0
        %421 = vmatmul.mubr.f32.gmra.mrb[0].mxu0 %v351
        %v422 = vpop.f32.mrb[0].mxu0
        %v423 = vadd.f32 0.0, %v422
        %v424 = vpop.f32.mrb[0].mxu0
        %425 = vmatprep.mubr.f32.mxu0 0.0
        %426 = vmatmul.mubr.f32.gmra.mrb[0].mxu0 %v353
        %v427 = vpop.f32.mrb[0].mxu0
        %v428 = vadd.f32 0.0, %v427
        %v429 = vpop.f32.mrb[0].mxu0
        %430 = vdwg.mxu0
        %431 = vmatprep.subr.mxu0 0.0
        %432 = vmatpush1.msra.mxu0 %v312
        %433 = vmatprep.subr.mxu0 0.0
        %434 = vmatpush1.msra.mxu0 %v313
        %435 = vmatprep.subr.mxu0 0.0
        %436 = vmatpush1.msra.mxu0 %v314
        %437 = vmatprep.subr.mxu0 0.0
        %438 = vmatpush1.msra.mxu0 %v315
        %439 = vmatprep.subr.mxu0 0.0
        %440 = vmatpush1.msra.mxu0 %v316
        %441 = vmatprep.subr.mxu0 0.0
        %442 = vmatpush1.msra.mxu0 %v317
        %443 = vmatprep.subr.mxu0 0.0
        %444 = vmatpush1.msra.mxu0 %v318
        %445 = vmatprep.subr.mxu0 0.0
        %446 = vmatpush1.msra.mxu0 %v319
        %447 = vmatprep.subr.mxu0 0.0
        %448 = vmatpush1.msra.mxu0 %v320
        %449 = vmatprep.subr.mxu0 0.0
        %450 = vmatpush1.msra.mxu0 %v321
        %451 = vmatprep.subr.mxu0 0.0
        %452 = vmatpush1.msra.mxu0 %v322
        %453 = vmatprep.subr.mxu0 0.0
        %454 = vmatpush1.msra.mxu0 %v323
        %455 = vmatprep.subr.mxu0 0.0
        %456 = vmatpush1.msra.mxu0 %v324
        %457 = vmatprep.subr.mxu0 0.0
        %458 = vmatpush1.msra.mxu0 %v325
        %459 = vmatprep.subr.mxu0 0.0
        %460 = vmatpush1.msra.mxu0 %v326
        %461 = vmatprep.subr.mxu0 0.0
        %462 = vmatpush1.msra.mxu0 %v327
        %463 = vmatprep.subr.mxu0 0.0
        %464 = vmatpush1.msra.mxu0 0.0
        %465 = vmatprep.subr.mxu0 0.0
        %466 = vmatpush1.msra.mxu0 0.0
        %467 = vmatprep.subr.mxu0 0.0
        %468 = vmatpush1.msra.mxu0 0.0
        %469 = vmatprep.subr.mxu0 0.0
        %470 = vmatpush1.msra.mxu0 0.0
        %471 = vmatprep.subr.mxu0 0.0
        %472 = vmatpush1.msra.mxu0 0.0
        %473 = vmatprep.subr.mxu0 0.0
        %474 = vmatpush1.msra.mxu0 0.0
        %475 = vmatprep.subr.mxu0 0.0
        %476 = vmatpush1.msra.mxu0 0.0
        %477 = vmatprep.subr.mxu0 0.0
        %478 = vmatpush1.msra.mxu0 0.0
        %479 = vmatprep.subr.mxu0 0.0
        %480 = vmatpush1.msra.mxu0 0.0
        %481 = vmatprep.subr.mxu0 0.0
        %482 = vmatpush1.msra.mxu0 0.0
        %483 = vmatprep.subr.mxu0 0.0
        %484 = vmatpush1.msra.mxu0 0.0
        %485 = vmatprep.subr.mxu0 0.0
        %486 = vmatpush1.msra.mxu0 0.0
        %487 = vmatprep.subr.mxu0 0.0
        %488 = vmatpush1.msra.mxu0 0.0
        %489 = vmatprep.subr.mxu0 0.0
        %490 = vmatpush1.msra.mxu0 0.0
        %491 = vmatprep.subr.mxu0 0.0
        %492 = vmatpush1.msra.mxu0 0.0
        %493 = vmatprep.subr.mxu0 0.0
        %494 = vmatpush1.msra.mxu0 0.0
        %495 = vmatprep.mubr.f32.mxu0 0.0
        %496 = vmatmul.mubr.f32.gmra.mrb[0].mxu0 %v309
        %v497 = vpop.f32.mrb[0].mxu0
        %v498 = vadd.f32 %v423, %v497
        %v499 = vpop.f32.mrb[0].mxu0
        %500 = vmatprep.mubr.f32.mxu0 0.0
        %501 = vmatmul.mubr.f32.gmra.mrb[0].mxu0 %v310
        %v502 = vpop.f32.mrb[0].mxu0
        %v503 = vadd.f32 %v428, %v502
        %v504 = vpop.f32.mrb[0].mxu0
        %505 = vdwg.mxu0
        %s506 = scalar_lea.vmem [#allocation7], 256
        %v507 = vld [vmem:[%s506] sm:$0xff]
        %v508 = vld [vmem:[%s506 + $0x8] sm:$0xff]
        %v509 = vld [vmem:[%s506 + $0x10] sm:$0xff]
        %v510 = vld [vmem:[%s506 + $0x18] sm:$0xff]
        %v511 = vld [vmem:[%s506 + $0x20] sm:$0xff]
        %v512 = vld [vmem:[%s506 + $0x28] sm:$0xff]
        %v513 = vld [vmem:[%s506 + $0x30] sm:$0xff]
        %v514 = vld [vmem:[%s506 + $0x38] sm:$0xff]
        %v515 = vld [vmem:[%s506 + $0x40] sm:$0xff]
        %v516 = vld [vmem:[%s506 + $0x48] sm:$0xff]
        %v517 = vld [vmem:[%s506 + $0x50] sm:$0xff]
        %v518 = vld [vmem:[%s506 + $0x58] sm:$0xff]
        %v519 = vld [vmem:[%s506 + $0x60] sm:$0xff]
        %v520 = vld [vmem:[%s506 + $0x68] sm:$0xff]
        %v521 = vld [vmem:[%s506 + $0x70] sm:$0xff]
        %v522 = vld [vmem:[%s506 + $0x78] sm:$0xff]
        %vm523 = vcmask 1045504
        %v524 = vrot.slane %v309, 2
        %v525 = vrot.slane %v310, 2
        %v526 = vsel %vm523, %v524, %v525
        %v527 = vrot.slane %v311, 2
        %v528 = vsel %vm523, %v525, %v527
        %531 = vmatprep.subr.mxu0 0.0
        %532 = vmatpush1.msra.mxu0 %v507
        %533 = vmatprep.subr.mxu0 0.0
        %534 = vmatpush1.msra.mxu0 %v508
        %535 = vmatprep.subr.mxu0 0.0
        %536 = vmatpush1.msra.mxu0 %v509
        %537 = vmatprep.subr.mxu0 0.0
        %538 = vmatpush1.msra.mxu0 %v510
        %539 = vmatprep.subr.mxu0 0.0
        %540 = vmatpush1.msra.mxu0 %v511
        %541 = vmatprep.subr.mxu0 0.0
        %542 = vmatpush1.msra.mxu0 %v512
        %543 = vmatprep.subr.mxu0 0.0
        %544 = vmatpush1.msra.mxu0 %v513
        %545 = vmatprep.subr.mxu0 0.0
        %546 = vmatpush1.msra.mxu0 %v514
        %547 = vmatprep.subr.mxu0 0.0
        %548 = vmatpush1.msra.mxu0 %v515
        %549 = vmatprep.subr.mxu0 0.0
        %550 = vmatpush1.msra.mxu0 %v516
        %551 = vmatprep.subr.mxu0 0.0
        %552 = vmatpush1.msra.mxu0 %v517
        %553 = vmatprep.subr.mxu0 0.0
        %554 = vmatpush1.msra.mxu0 %v518
        %555 = vmatprep.subr.mxu0 0.0
        %556 = vmatpush1.msra.mxu0 %v519
        %557 = vmatprep.subr.mxu0 0.0
        %558 = vmatpush1.msra.mxu0 %v520
        %559 = vmatprep.subr.mxu0 0.0
        %560 = vmatpush1.msra.mxu0 %v521
        %561 = vmatprep.subr.mxu0 0.0
        %562 = vmatpush1.msra.mxu0 %v522
        %563 = vmatprep.subr.mxu0 0.0
        %564 = vmatpush1.msra.mxu0 0.0
        %565 = vmatprep.subr.mxu0 0.0
        %566 = vmatpush1.msra.mxu0 0.0
        %567 = vmatprep.subr.mxu0 0.0
        %568 = vmatpush1.msra.mxu0 0.0
        %569 = vmatprep.subr.mxu0 0.0
        %570 = vmatpush1.msra.mxu0 0.0
        %571 = vmatprep.subr.mxu0 0.0
        %572 = vmatpush1.msra.mxu0 0.0
        %573 = vmatprep.subr.mxu0 0.0
        %574 = vmatpush1.msra.mxu0 0.0
        %575 = vmatprep.subr.mxu0 0.0
        %576 = vmatpush1.msra.mxu0 0.0
        %577 = vmatprep.subr.mxu0 0.0
        %578 = vmatpush1.msra.mxu0 0.0
        %579 = vmatprep.subr.mxu0 0.0
        %580 = vmatpush1.msra.mxu0 0.0
        %581 = vmatprep.subr.mxu0 0.0
        %582 = vmatpush1.msra.mxu0 0.0
        %583 = vmatprep.subr.mxu0 0.0
        %584 = vmatpush1.msra.mxu0 0.0
        %585 = vmatprep.subr.mxu0 0.0
        %586 = vmatpush1.msra.mxu0 0.0
        %587 = vmatprep.subr.mxu0 0.0
        %588 = vmatpush1.msra.mxu0 0.0
        %589 = vmatprep.subr.mxu0 0.0
        %590 = vmatpush1.msra.mxu0 0.0
        %591 = vmatprep.subr.mxu0 0.0
        %592 = vmatpush1.msra.mxu0 0.0
        %593 = vmatprep.subr.mxu0 0.0
        %594 = vmatpush1.msra.mxu0 0.0
        %595 = vmatprep.mubr.f32.mxu0 0.0
        %596 = vmatmul.mubr.f32.gmra.mrb[0].mxu0 %v526
        %v597 = vpop.f32.mrb[0].mxu0
        %v598 = vadd.f32 0.0, %v597
        %v599 = vpop.f32.mrb[0].mxu0
        %600 = vmatprep.mubr.f32.mxu0 0.0
        %601 = vmatmul.mubr.f32.gmra.mrb[0].mxu0 %v528
        %v602 = vpop.f32.mrb[0].mxu0
        %v603 = vadd.f32 0.0, %v602
        %v604 = vpop.f32.mrb[0].mxu0
        %605 = vdwg.mxu0
        %v606 = vadd.f32 %v498, %v598
        %v607 = vadd.f32 %v503, %v603
        %s608 = scalar_lea.vmem [#allocation7], 384
        %v609 = vld [vmem:[%s608] sm:$0xff]
        %v610 = vld [vmem:[%s608 + $0x8] sm:$0xff]
        %v611 = vld [vmem:[%s608 + $0x10] sm:$0xff]
        %v612 = vld [vmem:[%s608 + $0x18] sm:$0xff]
        %v613 = vld [vmem:[%s608 + $0x20] sm:$0xff]
        %v614 = vld [vmem:[%s608 + $0x28] sm:$0xff]
        %v615 = vld [vmem:[%s608 + $0x30] sm:$0xff]
        %v616 = vld [vmem:[%s608 + $0x38] sm:$0xff]
        %v617 = vld [vmem:[%s608 + $0x40] sm:$0xff]
        %v618 = vld [vmem:[%s608 + $0x48] sm:$0xff]
        %v619 = vld [vmem:[%s608 + $0x50] sm:$0xff]
        %v620 = vld [vmem:[%s608 + $0x58] sm:$0xff]
        %v621 = vld [vmem:[%s608 + $0x60] sm:$0xff]
        %v622 = vld [vmem:[%s608 + $0x68] sm:$0xff]
        %v623 = vld [vmem:[%s608 + $0x70] sm:$0xff]
        %v624 = vld [vmem:[%s608 + $0x78] sm:$0xff]
        %vm625 = vcmask 1044480
        %v626 = vrot.slane %v309, 3
        %v627 = vrot.slane %v310, 3
        %v628 = vsel %vm625, %v626, %v627
        %v629 = vrot.slane %v311, 3
        %v630 = vsel %vm625, %v627, %v629
        %633 = vmatprep.subr.mxu0 0.0
        %634 = vmatpush1.msra.mxu0 %v609
        %635 = vmatprep.subr.mxu0 0.0
        %636 = vmatpush1.msra.mxu0 %v610
        %637 = vmatprep.subr.mxu0 0.0
        %638 = vmatpush1.msra.mxu0 %v611
        %639 = vmatprep.subr.mxu0 0.0
        %640 = vmatpush1.msra.mxu0 %v612
        %641 = vmatprep.subr.mxu0 0.0
        %642 = vmatpush1.msra.mxu0 %v613
        %643 = vmatprep.subr.mxu0 0.0
        %644 = vmatpush1.msra.mxu0 %v614
        %645 = vmatprep.subr.mxu0 0.0
        %646 = vmatpush1.msra.mxu0 %v615
        %647 = vmatprep.subr.mxu0 0.0
        %648 = vmatpush1.msra.mxu0 %v616
        %649 = vmatprep.subr.mxu0 0.0
        %650 = vmatpush1.msra.mxu0 %v617
        %651 = vmatprep.subr.mxu0 0.0
        %652 = vmatpush1.msra.mxu0 %v618
        %653 = vmatprep.subr.mxu0 0.0
        %654 = vmatpush1.msra.mxu0 %v619
        %655 = vmatprep.subr.mxu0 0.0
        %656 = vmatpush1.msra.mxu0 %v620
        %657 = vmatprep.subr.mxu0 0.0
        %658 = vmatpush1.msra.mxu0 %v621
        %659 = vmatprep.subr.mxu0 0.0
        %660 = vmatpush1.msra.mxu0 %v622
        %661 = vmatprep.subr.mxu0 0.0
        %662 = vmatpush1.msra.mxu0 %v623
        %663 = vmatprep.subr.mxu0 0.0
        %664 = vmatpush1.msra.mxu0 %v624
        %665 = vmatprep.subr.mxu0 0.0
        %666 = vmatpush1.msra.mxu0 0.0
        %667 = vmatprep.subr.mxu0 0.0
        %668 = vmatpush1.msra.mxu0 0.0
        %669 = vmatprep.subr.mxu0 0.0
        %670 = vmatpush1.msra.mxu0 0.0
        %671 = vmatprep.subr.mxu0 0.0
        %672 = vmatpush1.msra.mxu0 0.0
        %673 = vmatprep.subr.mxu0 0.0
        %674 = vmatpush1.msra.mxu0 0.0
        %675 = vmatprep.subr.mxu0 0.0
        %676 = vmatpush1.msra.mxu0 0.0
        %677 = vmatprep.subr.mxu0 0.0
        %678 = vmatpush1.msra.mxu0 0.0
        %679 = vmatprep.subr.mxu0 0.0
        %680 = vmatpush1.msra.mxu0 0.0
        %681 = vmatprep.subr.mxu0 0.0
        %682 = vmatpush1.msra.mxu0 0.0
        %683 = vmatprep.subr.mxu0 0.0
        %684 = vmatpush1.msra.mxu0 0.0
        %685 = vmatprep.subr.mxu0 0.0
        %686 = vmatpush1.msra.mxu0 0.0
        %687 = vmatprep.subr.mxu0 0.0
        %688 = vmatpush1.msra.mxu0 0.0
        %689 = vmatprep.subr.mxu0 0.0
        %690 = vmatpush1.msra.mxu0 0.0
        %691 = vmatprep.subr.mxu0 0.0
        %692 = vmatpush1.msra.mxu0 0.0
        %693 = vmatprep.subr.mxu0 0.0
        %694 = vmatpush1.msra.mxu0 0.0
        %695 = vmatprep.subr.mxu0 0.0
        %696 = vmatpush1.msra.mxu0 0.0
        %697 = vmatprep.mubr.f32.mxu0 0.0
        %698 = vmatmul.mubr.f32.gmra.mrb[0].mxu0 %v628
        %v699 = vpop.f32.mrb[0].mxu0
        %v700 = vadd.f32 0.0, %v699
        %v701 = vpop.f32.mrb[0].mxu0
        %702 = vmatprep.mubr.f32.mxu0 0.0
        %703 = vmatmul.mubr.f32.gmra.mrb[0].mxu0 %v630
        %v704 = vpop.f32.mrb[0].mxu0
        %v705 = vadd.f32 0.0, %v704
        %v706 = vpop.f32.mrb[0].mxu0
        %707 = vdwg.mxu0
        %v708 = vadd.f32 %v606, %v700
        %v709 = vadd.f32 %v607, %v705
        %s710 = scalar_lea.vmem [#allocation7], 512
        %v711 = vld [vmem:[%s710] sm:$0xff]
        %v712 = vld [vmem:[%s710 + $0x8] sm:$0xff]
        %v713 = vld [vmem:[%s710 + $0x10] sm:$0xff]
        %v714 = vld [vmem:[%s710 + $0x18] sm:$0xff]
        %v715 = vld [vmem:[%s710 + $0x20] sm:$0xff]
        %v716 = vld [vmem:[%s710 + $0x28] sm:$0xff]
        %v717 = vld [vmem:[%s710 + $0x30] sm:$0xff]
        %v718 = vld [vmem:[%s710 + $0x38] sm:$0xff]
        %v719 = vld [vmem:[%s710 + $0x40] sm:$0xff]
        %v720 = vld [vmem:[%s710 + $0x48] sm:$0xff]
        %v721 = vld [vmem:[%s710 + $0x50] sm:$0xff]
        %v722 = vld [vmem:[%s710 + $0x58] sm:$0xff]
        %v723 = vld [vmem:[%s710 + $0x60] sm:$0xff]
        %v724 = vld [vmem:[%s710 + $0x68] sm:$0xff]
        %v725 = vld [vmem:[%s710 + $0x70] sm:$0xff]
        %v726 = vld [vmem:[%s710 + $0x78] sm:$0xff]
        %vm727 = vcmask 1043456
        %v728 = vrot.slane %v309, 4
        %v729 = vrot.slane %v310, 4
        %v730 = vsel %vm727, %v728, %v729
        %v731 = vrot.slane %v311, 4
        %v732 = vsel %vm727, %v729, %v731
        %735 = vmatprep.subr.mxu0 0.0
        %736 = vmatpush1.msra.mxu0 %v711
        %737 = vmatprep.subr.mxu0 0.0
        %738 = vmatpush1.msra.mxu0 %v712
        %739 = vmatprep.subr.mxu0 0.0
        %740 = vmatpush1.msra.mxu0 %v713
        %741 = vmatprep.subr.mxu0 0.0
        %742 = vmatpush1.msra.mxu0 %v714
        %743 = vmatprep.subr.mxu0 0.0
        %744 = vmatpush1.msra.mxu0 %v715
        %745 = vmatprep.subr.mxu0 0.0
        %746 = vmatpush1.msra.mxu0 %v716
        %747 = vmatprep.subr.mxu0 0.0
        %748 = vmatpush1.msra.mxu0 %v717
        %749 = vmatprep.subr.mxu0 0.0
        %750 = vmatpush1.msra.mxu0 %v718
        %751 = vmatprep.subr.mxu0 0.0
        %752 = vmatpush1.msra.mxu0 %v719
        %753 = vmatprep.subr.mxu0 0.0
        %754 = vmatpush1.msra.mxu0 %v720
        %755 = vmatprep.subr.mxu0 0.0
        %756 = vmatpush1.msra.mxu0 %v721
        %757 = vmatprep.subr.mxu0 0.0
        %758 = vmatpush1.msra.mxu0 %v722
        %759 = vmatprep.subr.mxu0 0.0
        %760 = vmatpush1.msra.mxu0 %v723
        %761 = vmatprep.subr.mxu0 0.0
        %762 = vmatpush1.msra.mxu0 %v724
        %763 = vmatprep.subr.mxu0 0.0
        %764 = vmatpush1.msra.mxu0 %v725
        %765 = vmatprep.subr.mxu0 0.0
        %766 = vmatpush1.msra.mxu0 %v726
        %767 = vmatprep.subr.mxu0 0.0
        %768 = vmatpush1.msra.mxu0 0.0
        %769 = vmatprep.subr.mxu0 0.0
        %770 = vmatpush1.msra.mxu0 0.0
        %771 = vmatprep.subr.mxu0 0.0
        %772 = vmatpush1.msra.mxu0 0.0
        %773 = vmatprep.subr.mxu0 0.0
        %774 = vmatpush1.msra.mxu0 0.0
        %775 = vmatprep.subr.mxu0 0.0
        %776 = vmatpush1.msra.mxu0 0.0
        %777 = vmatprep.subr.mxu0 0.0
        %778 = vmatpush1.msra.mxu0 0.0
        %779 = vmatprep.subr.mxu0 0.0
        %780 = vmatpush1.msra.mxu0 0.0
        %781 = vmatprep.subr.mxu0 0.0
        %782 = vmatpush1.msra.mxu0 0.0
        %783 = vmatprep.subr.mxu0 0.0
        %784 = vmatpush1.msra.mxu0 0.0
        %785 = vmatprep.subr.mxu0 0.0
        %786 = vmatpush1.msra.mxu0 0.0
        %787 = vmatprep.subr.mxu0 0.0
        %788 = vmatpush1.msra.mxu0 0.0
        %789 = vmatprep.subr.mxu0 0.0
        %790 = vmatpush1.msra.mxu0 0.0
        %791 = vmatprep.subr.mxu0 0.0
        %792 = vmatpush1.msra.mxu0 0.0
        %793 = vmatprep.subr.mxu0 0.0
        %794 = vmatpush1.msra.mxu0 0.0
        %795 = vmatprep.subr.mxu0 0.0
        %796 = vmatpush1.msra.mxu0 0.0
        %797 = vmatprep.subr.mxu0 0.0
        %798 = vmatpush1.msra.mxu0 0.0
        %799 = vmatprep.mubr.f32.mxu0 0.0
        %800 = vmatmul.mubr.f32.gmra.mrb[0].mxu0 %v730
        %v801 = vpop.f32.mrb[0].mxu0
        %v802 = vadd.f32 0.0, %v801
        %v803 = vpop.f32.mrb[0].mxu0
        %804 = vmatprep.mubr.f32.mxu0 0.0
        %805 = vmatmul.mubr.f32.gmra.mrb[0].mxu0 %v732
        %v806 = vpop.f32.mrb[0].mxu0
        %v807 = vadd.f32 0.0, %v806
        %v808 = vpop.f32.mrb[0].mxu0
        %809 = vdwg.mxu0
        %v810 = vadd.f32 %v708, %v802
        %v811 = vadd.f32 %v709, %v807
        %v812 = vld [vmem:[%s3] sm:$0x1]
        %v814 = vlaneseq
        %v815 = vshrl.u32 %v814, 7
        %v816 = vsub.s32 0, %v815
        %v817 = vrot.slane %v812, %v816
        %v819 = vadd.f32 %v810, %v817
        %v820 = vadd.f32 %v811, %v817
        %v821 = vmax.f32 %v819, 0.0
        %v822 = vmax.f32 %v820, 0.0
        %823 = vst [vmem:[%s300] sm:$0xff] %v821
        %824 = vst [vmem:[%s300 + $0x8] sm:$0xff] %v822
        %s825 = sand.u32 %s148, 1
        %s826 = scalar_lea.sflag [#allocation4], %s825
        %s827 = sand.u32 %s148, 1
        %s828 = smul.addr %s827, 16
        %s829 = scalar_lea.vmem [#allocation8], %s828
        // Predicated region
        $region49: #{tpu_custom_call.1} parent=35 // pred_check
          %p830 = pneg %p158
        $region50: #{tpu_custom_call.1} parent=35 // pred_check_branch
          %832 = sbr.rel (%p830) target = $region52
        $region51: #{tpu_custom_call.1} parent=35 // pred_region
          %s833 = smul.u32 2, %s29
          %s835 = ssub.s32 256, 256
          %836 = vsyncadd %s826, %s835
          %s837 = smul.addr %s28, 6
          %s838 = sadd.s32 %s833, %s837
          %s839 = smul.addr %s838, 128
          %s840 = scalar_lea.hbm %s4, %s839
          %s841 = sshll.u32 %s829, 4
          %s842 = int_to_ptr.vmem [resolvable:$true] %s841
          %847 = dma.vmem_to_hbm [thread:$0]  %s842, 256, %s840, %s826, 128, 128, 8
        $region52: #{tpu_custom_call.1} parent=35 // pred_fallthru
          _
      $region36: #{tpu_custom_call.1} parent=5 // pred_fallthru
        _
      %p848 = scmp.le.s32.totalorder 2, %s19
      // Predicated region
      $region53: #{tpu_custom_call.1} parent=5 // pred_check
        %p849 = pneg %p848
      $region54: #{tpu_custom_call.1} parent=5 // pred_check_branch
        %851 = sbr.rel (%p849) target = $region56
      $region55: #{tpu_custom_call.1} parent=5 // pred_region
        %s852 = ssub.s32 %s19, 2
        // Predicated region
        $region57: #{tpu_custom_call.1} parent=55 // pred_check
          %p853 = pneg %p164
        $region58: #{tpu_custom_call.1} parent=55 // pred_check_branch
          %855 = sbr.rel (%p853) target = $region60
        $region59: #{tpu_custom_call.1} parent=55 // pred_region
          %s856 = sand.u32 %s149, 1
          %s857 = scalar_lea.sflag [#allocation4], %s856
          %s858 = sand.u32 %s149, 1
          %s859 = smul.addr %s858, 16
          %s860 = scalar_lea.vmem [#allocation8], %s859
          %861 = dma.done %s857, 256
        $region60: #{tpu_custom_call.1} parent=55 // pred_fallthru
          _
      $region56: #{tpu_custom_call.1} parent=5 // pred_fallthru
        _
    $region6: #{tpu_custom_call.1} parent=1 // loop_footer
      %s23 = sadd.s32 1, %s19
    $region7: #{tpu_custom_call.1} parent=1 // loop_footer_branch
      %18 = sbr.rel target = $region3
    $region8: #{tpu_custom_call.1} parent=1 // loop_exit
      _
    %862 = vsyncpa [#allocation3], 1
    %s863 = scalar_lea.sflag [#allocation3], 1
    %864 = vsyncpa %s863, 1
    %865 = vsyncpa [#allocation6], 1
    %s866 = scalar_lea.sflag [#allocation6], 1
    %867 = vsyncpa %s866, 1
    %868 = vsyncpa [#allocation4], 1
    %s869 = scalar_lea.sflag [#allocation4], 1
    %870 = vsyncpa %s869, 1

</llo_original>
